<compile_context>
chip_gen: v6e
topology: v6e:2x2x1
jax: 0.10.0
libtpu: 0.0.40
codegen_flags: <defaults>
</compile_context>

<pallas_src>
import functools

import jax
import jax.numpy as jnp
from jax.experimental import pallas as pl
from jax.experimental.pallas import tpu as pltpu

LANES = 128
STAT_SUBLANES = 8  # f32 min-tile rows for the tiny per-block statistic output


def _quant_softsign_kernel(params_ref, x_ref, o_ref, stat_ref, *,
                           bits, block_rows, total_rows, mask_tail):
    """Elementwise hot path: softsign + signed-int fake-quant + fused max-|y| stat."""
    qmax = float(2 ** (bits - 1) - 1)
    qmin = -float(2 ** (bits - 1))
    scale = params_ref[0]       # scalar scale from SMEM
    inv_scale = params_ref[1]   # precomputed 1/scale from SMEM (no per-step divide)

    x = x_ref[...].astype(jnp.float32)
    # Exact f32 divide on purpose: the kernel is HBM-bandwidth bound so the divide is
    # free filler, and it keeps round() bit-consistent with the exact-math reference
    # (pl.reciprocal(approx=True) can flip round() exactly at quantization boundaries).
    y = x / (1.0 + jnp.abs(x))                           # softsign
    q = jnp.clip(jnp.round(y * inv_scale), qmin, qmax)   # quantize to signed-int grid
    o_ref[...] = (q * scale).astype(o_ref.dtype)         # dequantize (fake-quant)

    # Fused runtime statistic: per-block max |softsign(x)| (the quantizer input).
    # Written as a distinct tiny (1, 8, 128) tile per grid step so the grid axis can
    # stay "parallel" (v7x megacore) instead of needing an "arbitrary" accumulator.
    a = jnp.abs(y)
    if mask_tail:  # static: only when the last grid block overruns the array extent
        row = (pl.program_id(0) * block_rows
               + jax.lax.broadcasted_iota(jnp.int32, a.shape, 0))
        a = jnp.where(row < total_rows, a, 0.0)
    part = jnp.max(a, axis=0, keepdims=True)             # (1, LANES) per-lane max
    stat_ref[...] = jnp.broadcast_to(part.reshape(1, 1, LANES), stat_ref.shape)


def _calibration_scale(x, bits):
    # First-call calibration only. softsign is monotone in |x|, so
    # max|softsign(x)| == softsign(max|x|): a single fused max-|x| reduction.
    # TODO(synk): brevitas ParamFromRuntimePercentileScaling accumulates a 99.999th
    # percentile statistic over 8192 training steps; here the calibration scale is
    # derived from the current batch's max, and subsequent calls carry/EMA the
    # in-kernel statistic returned by quant_softsign().
    qmax = 2 ** (bits - 1) - 1
    max_abs = jnp.max(jnp.abs(x)).astype(jnp.float32)
    thr = max_abs / (1.0 + max_abs)
    return jnp.maximum(thr, 1e-8) / qmax


def _vmem_budget():
    """(bytes per f32 I/O buffer, vmem_limit_bytes) — generation aware, safe default."""
    per_buf, limit = 4 << 20, 48 << 20          # safe everywhere (v7x: 64 MiB/TC VMEM)
    try:
        kind = jax.devices()[0].device_kind.lower()
        if ("v5" in kind) or ("v6" in kind):    # 128 MiB physical VMEM per TensorCore
            per_buf, limit = 8 << 20, 96 << 20
    except Exception:
        pass
    return per_buf, limit


def quant_softsign(x, bits=4, scale=None):
    """Softsign + signed-int fake-quant. Returns (out, next_scale).

    If `scale` is None the scale is calibrated from the current batch (one extra
    max-|x| pass). Passing the previous call's `next_scale` (optionally EMA'd by the
    caller) skips that pass entirely — the statistic is accumulated inside the kernel.
    """
    orig_shape = x.shape
    orig_dtype = x.dtype
    n = x.size
    qmax = 2 ** (bits - 1) - 1

    if scale is None:
        scale = _calibration_scale(x, bits)
    scale = jnp.asarray(scale, jnp.float32).reshape(())
    params = jnp.stack([scale, 1.0 / scale])             # (2,) f32 scalars -> SMEM

    # --- flatten to a lane-dense (rows, 128) slab, dtype-aware sublane multiple ---
    itemsize = jnp.dtype(orig_dtype).itemsize
    sub = {4: 8, 2: 16, 1: 32}.get(itemsize, 8)
    xf = x.reshape(-1)
    pad = (-n) % (LANES * sub)
    if pad:
        # TODO(synk): for ragged sizes this pad + the final slice are each a
        # full-tensor HBM copy; a masked-tail store path would remove both.
        xf = jnp.pad(xf, (0, pad))
    rows = xf.size // LANES                               # multiple of `sub`
    x2 = xf.reshape(rows, LANES)

    # --- block selection: biggest aligned block under the VMEM budget; no forced
    #     grid split for small inputs (the grid is a serial loop per TensorCore) ---
    per_buf_bytes, vmem_limit = _vmem_budget()
    max_rows = max(sub, (per_buf_bytes // (LANES * 4)) // sub * sub)  # f32-equiv sizing
    block_rows = min(rows, max_rows)
    num_blocks = pl.cdiv(rows, block_rows)
    mask_tail = (rows % block_rows) != 0                  # partial last block?

    kernel = functools.partial(
        _quant_softsign_kernel, bits=int(bits), block_rows=int(block_rows),
        total_rows=int(rows), mask_tail=bool(mask_tail))

    out2, stat = pl.pallas_call(
        kernel,
        out_shape=(
            jax.ShapeDtypeStruct((rows, LANES), orig_dtype),
            jax.ShapeDtypeStruct((num_blocks, STAT_SUBLANES, LANES), jnp.float32),
        ),
        grid=(num_blocks,),
        in_specs=[
            pl.BlockSpec(memory_space=pltpu.MemorySpace.SMEM),      # [scale, 1/scale]
            pl.BlockSpec((block_rows, LANES), lambda i: (i, 0)),    # x tile
        ],
        out_specs=(
            pl.BlockSpec((block_rows, LANES), lambda i: (i, 0)),    # out tile
            pl.BlockSpec((1, STAT_SUBLANES, LANES), lambda i: (i, 0, 0)),  # per-block stat
        ),
        compiler_params=pltpu.CompilerParams(
            dimension_semantics=("parallel",),   # shards across v7x's 2 TCs; ~no-op v5e/v6e
            vmem_limit_bytes=vmem_limit,
        ),
    )(params, x2)

    out_flat = out2.reshape(-1)
    if pad:
        out_flat = out_flat[:n]
    out = out_flat.reshape(orig_shape)

    # Next-step scale from the fused in-kernel statistic (tiny reduce over num_blocks
    # x 8 x 128 elements); caller may EMA it across steps, brevitas-style.
    next_scale = jnp.maximum(jnp.max(stat), 1e-8) / qmax
    return out, next_scale


if __name__ == "__main__":
    key = jax.random.PRNGKey(0)
    # NCHW activations, small shape consistent with a conv-net activation.
    x = 2.0 * jax.random.normal(key, (2, 4, 16, 16), dtype=jnp.float32)
    bits = 4
    qmax = 2 ** (bits - 1) - 1
    qmin = -(2 ** (bits - 1))

    # Call 1: calibration path (scale from this batch).
    out, next_scale = quant_softsign(x, bits=bits)
    out, next_scale = jax.block_until_ready((out, next_scale))

    # pure-JAX reference with the same scale and op ordering
    scale_used = _calibration_scale(x, bits)
    y = x / (1.0 + jnp.abs(x))
    ref = jnp.clip(jnp.round(y * (1.0 / scale_used)), qmin, qmax) * scale_used

    assert out.shape == x.shape
    assert float(jnp.max(jnp.abs(out))) < 1.0 + 1e-6            # softsign range
    codes = out / scale_used                                     # on the int grid
    assert float(jnp.max(jnp.abs(codes - jnp.round(codes)))) < 1e-3
    assert float(jnp.max(codes)) <= qmax + 1e-3
    assert float(jnp.min(codes)) >= qmin - 1e-3
    # within half a quantization step of true softsign
    assert float(jnp.max(jnp.abs(out - y))) <= 0.5 * float(scale_used) + 1e-5
    # elementwise match vs exact-math reference (tolerate at most a couple of
    # round-to-nearest ties flipping exactly at grid boundaries)
    assert int(jnp.sum(jnp.abs(out - ref) > 1e-5)) <= 2

    # Call 2: reuse the fused in-kernel statistic -> no standalone max-|x| pass.
    out2, _ = quant_softsign(x, bits=bits, scale=next_scale)
    out2 = jax.block_until_ready(out2)
    assert out2.shape == x.shape
    assert bool(jnp.allclose(next_scale, scale_used, rtol=1e-5, atol=1e-8))
    assert float(jnp.max(jnp.abs(out2 - y))) <= 0.5 * float(next_scale) + 1e-5

    print("KERNEL_OK")
</pallas_src>

<mosaic_0001>
module attributes {stable_mosaic.version = 11 : i64} {
  func.func @_quant_softsign_kernel(%arg0: i32, %arg1: memref<2xf32, #tpu.memory_space<smem>>, %arg2: memref<16x128xf32, #tpu.memory_space<vmem>>, %arg3: memref<16x128xf32, #tpu.memory_space<vmem>>, %arg4: memref<1x8x128xf32, #tpu.memory_space<vmem>>) attributes {dimension_semantics = [#tpu.dimension_semantics<parallel>], iteration_bounds = array<i64: 1>, scalar_prefetch = 0 : i64, scratch_operands = 0 : i64, tpu.core_type = #tpu.core_type<tc>, window_params = [{transform_indices = @transform_0, window_bounds = array<i64: 2>}, {transform_indices = @transform_1, window_bounds = array<i64: 16, 128>}, {transform_indices = @transform_2, window_bounds = array<i64: 16, 128>}, {transform_indices = @transform_3, window_bounds = array<i64: 1, 8, 128>}]} {
    %c0 = arith.constant 0 : index
    %0 = memref.load %arg1[%c0] : memref<2xf32, #tpu.memory_space<smem>>
    %c1 = arith.constant 1 : index
    %1 = memref.load %arg1[%c1] : memref<2xf32, #tpu.memory_space<smem>>
    %c0_0 = arith.constant 0 : index
    %c0_1 = arith.constant 0 : index
    %2 = vector.load %arg2[%c0_0, %c0_1] : memref<16x128xf32, #tpu.memory_space<vmem>>, vector<16x128xf32>
    %3 = math.absf %2 : vector<16x128xf32>
    %cst = arith.constant 1.000000e+00 : f32
    %4 = vector.broadcast %cst : f32 to vector<16x128xf32>
    %5 = arith.addf %4, %3 : vector<16x128xf32>
    %6 = arith.divf %2, %5 : vector<16x128xf32>
    %7 = vector.broadcast %1 : f32 to vector<16x128xf32>
    %8 = arith.mulf %6, %7 : vector<16x128xf32>
    %9 = math.roundeven %8 : vector<16x128xf32>
    %cst_2 = arith.constant -8.000000e+00 : f32
    %cst_3 = arith.constant 7.000000e+00 : f32
    %10 = vector.broadcast %cst_2 : f32 to vector<16x128xf32>
    %11 = arith.maximumf %10, %9 : vector<16x128xf32>
    %12 = vector.broadcast %cst_3 : f32 to vector<16x128xf32>
    %13 = arith.minimumf %12, %11 : vector<16x128xf32>
    %14 = vector.broadcast %0 : f32 to vector<16x128xf32>
    %15 = arith.mulf %13, %14 : vector<16x128xf32>
    %c0_4 = arith.constant 0 : index
    %c0_5 = arith.constant 0 : index
    %16 = vector.load %arg3[%c0_4, %c0_5] : memref<16x128xf32, #tpu.memory_space<vmem>>, vector<16x128xf32>
    tpu.vector_store %arg3[%c0_4, %c0_5], %15 {strides = array<i32>} : memref<16x128xf32, #tpu.memory_space<vmem>>, vector<16x128xf32>,
    %17 = math.absf %6 : vector<16x128xf32>
    %cst_6 = arith.constant dense<0xFF800000> : vector<128xf32>
    %18 = vector.multi_reduction <maximumf>, %17, %cst_6 [0] : vector<16x128xf32> to vector<128xf32>
    %19 = vector.shape_cast %18 : vector<128xf32> to vector<1x128xf32>
    %20 = vector.shape_cast %19 : vector<1x128xf32> to vector<1x1x128xf32>
    %21 = vector.shape_cast %20 : vector<1x1x128xf32> to vector<1x1x128xf32>
    %22 = vector.broadcast %21 : vector<1x1x128xf32> to vector<1x8x128xf32>
    %c0_7 = arith.constant 0 : index
    %c0_8 = arith.constant 0 : index
    %c0_9 = arith.constant 0 : index
    %23 = vector.load %arg4[%c0_7, %c0_8, %c0_9] : memref<1x8x128xf32, #tpu.memory_space<vmem>>, vector<1x8x128xf32>
    tpu.vector_store %arg4[%c0_7, %c0_8, %c0_9], %22 {strides = array<i32>} : memref<1x8x128xf32, #tpu.memory_space<vmem>>, vector<1x8x128xf32>,
    return
  }
  func.func @transform_0(%arg0: i32) -> i32 {
    %c0_i32 = arith.constant 0 : i32
    %c0_i32_0 = arith.constant 0 : i32
    return %c0_i32 : i32
  }
  func.func @transform_1(%arg0: i32) -> (i32, i32) {
    %c0_i32 = arith.constant 0 : i32
    %c0_i32_0 = arith.constant 0 : i32
    return %arg0, %c0_i32 : i32, i32
  }
  func.func @transform_2(%arg0: i32) -> (i32, i32) {
    %c0_i32 = arith.constant 0 : i32
    %c0_i32_0 = arith.constant 0 : i32
    return %arg0, %c0_i32 : i32, i32
  }
  func.func @transform_3(%arg0: i32) -> (i32, i32, i32) {
    %c0_i32 = arith.constant 0 : i32
    %c0_i32_0 = arith.constant 0 : i32
    %c0_i32_1 = arith.constant 0 : i32
    return %arg0, %c0_i32, %c0_i32_0 : i32, i32, i32
  }
}

</mosaic_0001>

<llo_original>
// kernel: tpu_custom_call.1
$region0: #{tpu_custom_call.1}
  #allocation0 [shape = 'u32[]', space=smem, size = 0x4, offset = 0x4, fixed_abs, tag = 'smem constant byte address 0x4 - core index']
  #allocation1 [shape = 'u32[144,128]{1,0:T(1,128)}', space=vmem, size = 0x12000, scoped, tag = 'internal scratch']
  %s0 = inlined_call_operand.hbm [shape: f32[2], index: 0, kind: input, shape index: {}]
  %s1 = inlined_call_operand.hbm [shape: f32[16,128], index: 1, kind: input, shape index: {}]
  %s2 = inlined_call_operand.hbm [shape: f32[16,128], index: 2, kind: output, shape index: {0}]
  %s3 = inlined_call_operand.hbm [shape: f32[1,8,128], index: 3, kind: output, shape index: {1}]
  %4 = xla_tuple %s2, %s3
  %s5 = sld [smem:[#allocation0]]
  $region34: #{tpu_custom_call.1} parent=0
    _
  %s7 = ssub.s32 1, %s5
  %s8 = scalar_select 0, %s7, %s5
  $region1: #{tpu_custom_call.1} parent=0
    #allocation2 [shape = 'u8[512]{0}', space=smem, size = 0x200, scoped, tag = 'input window, operand 0, single buffered']
    #allocation3 [shape = 's32[1]{0}', space=sflag, size = 0x4, scoped, tag = 'scoped memory for tpu_custom_call.1']
    #allocation4 [shape = 's32[1]{0}', space=sflag, size = 0x4, scoped, tag = 'scoped memory for tpu_custom_call.1']
    #allocation5 [shape = 's32[1]{0}', space=sflag, size = 0x4, scoped, tag = 'scoped memory for tpu_custom_call.1']
    #allocation6 [shape = 'u8[8192]{0}', space=vmem, size = 0x2000, scoped, tag = 'input window, operand 1, single buffered']
    #allocation7 [shape = 'u8[8192]{0}', space=vmem, size = 0x2000, scoped, tag = 'output window, operand 0, single buffered']
    #allocation8 [shape = 'u8[4096]{0}', space=vmem, size = 0x1000, scoped, tag = 'output window, operand 1, single buffered']
    #allocation9 [shape = 's32[1]{0}', space=sflag, size = 0x4, scoped, tag = 'scoped memory for tpu_custom_call.1']
    %9 = vsyncpa [#allocation5], 0
    %10 = vsyncpa [#allocation3], 0
    %11 = vsyncpa [#allocation4], 0
    %12 = vsyncpa [#allocation9], 0
    // Predicated region
    $region2: #{tpu_custom_call.1} parent=1 // pred_check
      _
    $region3: #{tpu_custom_call.1} parent=1 // pred_check_branch
      %14 = sbr.rel (0) target = $region5
    $region4: #{tpu_custom_call.1} parent=1 // pred_region
      %s16 = ssub.s32 16, 16
      %17 = vsyncadd [#allocation5], %s16
      %20 = dma.hbm_to_smem %s0, 16, [#allocation2], [#allocation5]
    $region5: #{tpu_custom_call.1} parent=1 // pred_fallthru
      _
    // Predicated region
    $region6: #{tpu_custom_call.1} parent=1 // pred_check
      _
    $region7: #{tpu_custom_call.1} parent=1 // pred_check_branch
      %22 = sbr.rel (0) target = $region9
    $region8: #{tpu_custom_call.1} parent=1 // pred_region
      %s24 = ssub.s32 256, 256
      %25 = vsyncadd [#allocation3], %s24
      %s26 = sshll.u32 [#allocation6], 4
      %s27 = int_to_ptr.vmem [resolvable:$true] %s26
      %32 = dma.hbm_to_vmem [thread:$0]  %s1, 256, %s27, [#allocation3], 128, 128, 8
    $region9: #{tpu_custom_call.1} parent=1 // pred_fallthru
      _
    // Predicated region
    $region10: #{tpu_custom_call.1} parent=1 // pred_check
      _
    $region11: #{tpu_custom_call.1} parent=1 // pred_check_branch
      %34 = sbr.rel (0) target = $region13
    $region12: #{tpu_custom_call.1} parent=1 // pred_region
      %35 = dma.done [#allocation5], 16
    $region13: #{tpu_custom_call.1} parent=1 // pred_fallthru
      _
    // Predicated region
    $region14: #{tpu_custom_call.1} parent=1 // pred_check
      _
    $region15: #{tpu_custom_call.1} parent=1 // pred_check_branch
      %37 = sbr.rel (0) target = $region17
    $region16: #{tpu_custom_call.1} parent=1 // pred_region
      %38 = dma.done [#allocation3], 256
    $region17: #{tpu_custom_call.1} parent=1 // pred_fallthru
      _
    %39 = sfence
    %s40 = sld [smem:[#allocation2]]
    %s41 = sld [smem:[#allocation2 + $0x1]]
    %v42 = vld [vmem:[#allocation6] sm:$0xff]
    %v43 = vld [vmem:[#allocation6 + $0x8] sm:$0xff]
    %v44 = vand.u32 2147483647, %v42
    %v45 = vand.u32 2147483647, %v43
    %v46 = vadd.f32 %v44, 1.0
    %v47 = vadd.f32 %v45, 1.0
    %v48 = vrcp.pop %v46
    %v49 = vmul.f32 %v42, %v48
    %v50 = vrcp.pop %v47
    %v51 = vmul.f32 %v43, %v50
    %v52 = vstv %s41
    %v53 = vmul.f32 %v49, %v52
    %v54 = vmul.f32 %v51, %v52
    %v55 = vround.ne.pseudo %v53
    %v56 = vround.ne.pseudo %v54
    %v57 = vmax.f32 %v55, -8.0
    %v58 = vmax.f32 %v56, -8.0
    %v59 = vmin.f32 %v57, 7.0
    %v60 = vmin.f32 %v58, 7.0
    %v61 = vstv %s40
    %v62 = vmul.f32 %v59, %v61
    %v63 = vmul.f32 %v60, %v61
    %64 = vst [vmem:[#allocation7] sm:$0xff] %v62
    %65 = vst [vmem:[#allocation7 + $0x8] sm:$0xff] %v63
    %v66 = vand.u32 2147483647, %v49
    %v67 = vand.u32 2147483647, %v51
    %v68 = vmax.f32 %v66, %v67
    %v69 = vrot.slane %v68, 4
    %v70 = vmax.f32 %v68, %v69
    %v71 = vrot.slane %v70, 2
    %v72 = vmax.f32 %v70, %v71
    %v73 = vrot.slane %v72, 1
    %v74 = vmax.f32 %v72, %v73
    %75 = vst [vmem:[#allocation8] sm:$0xff] %v74
    // Predicated region
    $region18: #{tpu_custom_call.1} parent=1 // pred_check
      _
    $region19: #{tpu_custom_call.1} parent=1 // pred_check_branch
      %77 = sbr.rel (0) target = $region21
    $region20: #{tpu_custom_call.1} parent=1 // pred_region
      %s79 = ssub.s32 256, 256
      %80 = vsyncadd [#allocation4], %s79
      %s81 = sshll.u32 [#allocation7], 4
      %s82 = int_to_ptr.vmem [resolvable:$true] %s81
      %87 = dma.vmem_to_hbm [thread:$0]  %s82, 256, %s2, [#allocation4], 128, 128, 8
    $region21: #{tpu_custom_call.1} parent=1 // pred_fallthru
      _
    // Predicated region
    $region22: #{tpu_custom_call.1} parent=1 // pred_check
      _
    $region23: #{tpu_custom_call.1} parent=1 // pred_check_branch
      %89 = sbr.rel (0) target = $region25
    $region24: #{tpu_custom_call.1} parent=1 // pred_region
      %s91 = ssub.s32 128, 128
      %92 = vsyncadd [#allocation9], %s91
      %s94 = sshll.u32 [#allocation8], 4
      %s95 = int_to_ptr.vmem [resolvable:$true] %s94
      %97 = dma.vmem_to_hbm [thread:$0]  %s95, 128, %s3, [#allocation9]
    $region25: #{tpu_custom_call.1} parent=1 // pred_fallthru
      _
    // Predicated region
    $region26: #{tpu_custom_call.1} parent=1 // pred_check
      _
    $region27: #{tpu_custom_call.1} parent=1 // pred_check_branch
      %99 = sbr.rel (0) target = $region29
    $region28: #{tpu_custom_call.1} parent=1 // pred_region
      %100 = dma.done [#allocation4], 256
    $region29: #{tpu_custom_call.1} parent=1 // pred_fallthru
      _
    // Predicated region
    $region30: #{tpu_custom_call.1} parent=1 // pred_check
      _
    $region31: #{tpu_custom_call.1} parent=1 // pred_check_branch
      %102 = sbr.rel (0) target = $region33
    $region32: #{tpu_custom_call.1} parent=1 // pred_region
      %103 = dma.done [#allocation9], 128
    $region33: #{tpu_custom_call.1} parent=1 // pred_fallthru
      _
    %104 = vsyncpa [#allocation3], 1
    %105 = vsyncpa [#allocation4], 1
    %106 = vsyncpa [#allocation9], 1
    %107 = vsyncpa [#allocation5], 1

</llo_original>
